<compile_context>
chip_gen: v7x
topology: tpu7x:2x2x1
jax: 0.10.0
libtpu: 0.0.40
codegen_flags: <defaults>
</compile_context>

<pallas_src>
import jax
import jax.numpy as jnp
from jax.experimental import pallas as pl
from jax.experimental.pallas import tpu as pltpu


# ----------------------------------------------------------------------------
# Kernels
# ----------------------------------------------------------------------------
def _ffn_kernel_resident(x_ref, w1_ref, b1_ref, w2_ref, b2_ref, o_ref):
    """Weights fully resident in VMEM (constant index_map -> fetched once).

    One fused matmul pair per token tile; bias add + ReLU in f32 (v5e VPU has
    no bf16), f32 MXU accumulation, downcast only at the final store.
    """
    x = x_ref[...].astype(w1_ref.dtype)            # cast in-kernel, in VMEM
    h = jnp.dot(x, w1_ref[...], preferred_element_type=jnp.float32)
    h = jnp.maximum(h + b1_ref[...].astype(jnp.float32), 0.0)
    y = jnp.dot(h.astype(w2_ref.dtype), w2_ref[...],
                preferred_element_type=jnp.float32)
    o_ref[...] = (y + b2_ref[...].astype(jnp.float32)).astype(o_ref.dtype)


def _ffn_kernel_slabbed(x_ref, w1_ref, b1_ref, w2_ref, b2_ref, o_ref):
    """H-slab reduction; f32 partial sums accumulate directly into the f32
    output block (resident across the k axis) — no separate VMEM scratch."""
    k = pl.program_id(1)

    @pl.when(k == 0)
    def _init():
        # Fold b2 into the accumulator init (broadcast once per token tile).
        o_ref[...] = jnp.broadcast_to(
            b2_ref[...].astype(jnp.float32), o_ref.shape)

    x = x_ref[...].astype(w1_ref.dtype)            # cast in-kernel, in VMEM
    h = jnp.dot(x, w1_ref[...], preferred_element_type=jnp.float32)
    h = jnp.maximum(h + b1_ref[...].astype(jnp.float32), 0.0)
    o_ref[...] += jnp.dot(h.astype(w2_ref.dtype), w2_ref[...],
                          preferred_element_type=jnp.float32)


# ----------------------------------------------------------------------------
# Tiling / budget helpers
# ----------------------------------------------------------------------------
def _round_up(x, m):
    return ((x + m - 1) // m) * m


def _divisor_tile(total, target, align):
    """Largest multiple of `align` <= target that evenly divides `total`,
    falling back to the full extent (block == full dim is always legal)."""
    if total <= target:
        return total
    t = (min(target, total) // align) * align
    while t >= align:
        if total % t == 0:
            return t
        t -= align
    return total


def _pick_tm(n, target, align=8):
    """Token tile: largest aligned divisor <= target, best-effort even tile
    count so the two v7x TensorCores get balanced work on the parallel axis."""
    tm = _divisor_tile(n, target, align)
    if tm < n and (n // tm) % 2 == 1:
        t = tm
        while t >= align:
            if n % t == 0 and (n // t) % 2 == 0:
                return t
            t -= align
    return tm


def _vmem_budget_bytes():
    try:
        cap = pltpu.get_tpu_info().vmem_capacity_bytes
    except Exception:
        cap = 64 * 1024 * 1024          # conservative (v7x-sized) fallback
    return int(cap) * 3 // 4            # ~48 MiB v7x, ~96 MiB v5e/v6e


# ----------------------------------------------------------------------------
# Wrapper
# ----------------------------------------------------------------------------
def ffn_block(x, w1, b1, w2, b2, *, tm=None, th=None, mode="auto",
              compute_dtype=jnp.bfloat16):
    """FFN_Block forward pass: y = relu(x @ W1 + b1) @ W2 + b2.

    x:  (N, D)      w1: (D, H)   b1: (1, H)   w2: (H, D)   b2: (1, D)
    mode: "auto" (weights-resident when they fit VMEM), "resident", "slabbed".
    """
    N, D = x.shape
    H = w1.shape[1]
    out_dtype = x.dtype

    # Pad feature dims to 128-lane multiples: unmasked full-lane output stores
    # and full MXU occupancy. Zero padding is numerically exact (extra W1 cols
    # give relu(b1_pad)=relu(0)=0, zero W2 rows/cols contribute nothing).
    # No-op for production shapes already multiples of 128.
    Dp = _round_up(D, 128)
    Hp = _round_up(H, 128)
    if Dp != D:
        x = jnp.pad(x, ((0, 0), (0, Dp - D)))
        w1 = jnp.pad(w1, ((0, Dp - D), (0, 0)))
        w2 = jnp.pad(w2, ((0, 0), (0, Dp - D)))
        b2 = jnp.pad(b2, ((0, 0), (0, Dp - D)))
    if Hp != H:
        w1 = jnp.pad(w1, ((0, 0), (0, Hp - H)))
        b1 = jnp.pad(b1, ((0, 0), (0, Hp - H)))
        w2 = jnp.pad(w2, ((0, Hp - H), (0, 0)))

    # Weights to bf16 for the MXU. In a real model store W1/W2 persistently in
    # compute_dtype so these are no-ops, not per-call HBM passes.
    w1c = w1 if w1.dtype == compute_dtype else w1.astype(compute_dtype)
    w2c = w2 if w2.dtype == compute_dtype else w2.astype(compute_dtype)
    b1c = b1.astype(jnp.float32)
    b2c = b2.astype(jnp.float32)
    # x is NOT cast in the wrapper: the kernel casts the tile in VMEM.

    x_bytes = jnp.dtype(x.dtype).itemsize
    out_bytes = jnp.dtype(out_dtype).itemsize
    budget = _vmem_budget_bytes()

    # ---- weights-resident specialization --------------------------------
    def resident_footprint(tm_):
        w_bytes = (Dp * Hp + Hp * Dp) * 2          # bf16 W1 + W2
        weights = 2 * w_bytes                      # double-buffered slots
        io = 2 * tm_ * Dp * (x_bytes + out_bytes)  # double-buffered x / out
        h_tmp = tm_ * Hp * 4                       # f32 intermediate
        return weights + io + h_tmp

    tm_target = tm if tm is not None else 512
    resident_tm = _pick_tm(N, tm_target)
    resident_ok = resident_footprint(resident_tm) <= budget

    if mode == "resident" or (mode == "auto" and resident_ok):
        TM = resident_tm
        out = pl.pallas_call(
            _ffn_kernel_resident,
            out_shape=jax.ShapeDtypeStruct((N, Dp), out_dtype),
            grid_spec=pltpu.PrefetchScalarGridSpec(
                num_scalar_prefetch=0,
                grid=(N // TM,),
                in_specs=[
                    pl.BlockSpec((TM, Dp), lambda i: (i, 0)),   # x tile
                    pl.BlockSpec((Dp, Hp), lambda i: (0, 0)),   # W1 (resident)
                    pl.BlockSpec((1, Hp), lambda i: (0, 0)),    # b1 (resident)
                    pl.BlockSpec((Hp, Dp), lambda i: (0, 0)),   # W2 (resident)
                    pl.BlockSpec((1, Dp), lambda i: (0, 0)),    # b2 (resident)
                ],
                out_specs=pl.BlockSpec((TM, Dp), lambda i: (i, 0)),
            ),
            compiler_params=pltpu.CompilerParams(
                dimension_semantics=("parallel",),
                vmem_limit_bytes=budget,
            ),
        )(x, w1c, b1c, w2c, b2c)
        return out[:, :D] if Dp != D else out

    # ---- H-slab streaming path -------------------------------------------
    tm_t = tm if tm is not None else 512
    th_t = th if th is not None else 1024

    def slab_footprint(tm_, th_):
        w_slabs = 2 * (2 * Dp * th_ * 2)   # W1 + W2 slabs, bf16, double-buffered
        x_tile = 2 * tm_ * Dp * x_bytes
        o_tile = 2 * tm_ * Dp * 4          # f32 accumulate-in-place output block
        h_tmp = tm_ * th_ * 4
        return w_slabs + x_tile + o_tile + h_tmp

    # Shrink TH first, then TM, until the footprint fits this generation's VMEM.
    while slab_footprint(tm_t, th_t) > budget and th_t > 128:
        th_t //= 2
    while slab_footprint(tm_t, th_t) > budget and tm_t > 64:
        tm_t //= 2

    TM = _pick_tm(N, tm_t)
    TH = _divisor_tile(Hp, th_t, 128)
    grid = (N // TM, Hp // TH)

    out = pl.pallas_call(
        _ffn_kernel_slabbed,
        out_shape=jax.ShapeDtypeStruct((N, Dp), jnp.float32),
        grid_spec=pltpu.PrefetchScalarGridSpec(
            num_scalar_prefetch=0,
            grid=grid,
            in_specs=[
                pl.BlockSpec((TM, Dp), lambda i, k: (i, 0)),   # x (resident over k)
                # If profiling shows exposed slab DMA, add
                # pipeline_mode=pl.Buffered(3) to the W1/W2 specs below.
                pl.BlockSpec((Dp, TH), lambda i, k: (0, k)),   # W1 H-slab
                pl.BlockSpec((1, TH), lambda i, k: (0, k)),    # b1 H-slab
                pl.BlockSpec((TH, Dp), lambda i, k: (k, 0)),   # W2 H-slab
                pl.BlockSpec((1, Dp), lambda i, k: (0, 0)),    # b2 (resident)
            ],
            out_specs=pl.BlockSpec((TM, Dp), lambda i, k: (i, 0)),
        ),
        compiler_params=pltpu.CompilerParams(
            dimension_semantics=("parallel", "arbitrary"),
            vmem_limit_bytes=budget,
        ),
    )(x, w1c, b1c, w2c, b2c)

    out = out[:, :D] if Dp != D else out
    if out.dtype != out_dtype:
        # TODO(synk): for a bf16 output variant accumulate in an f32 VMEM
        # scratch inside the kernel instead of casting here.
        out = out.astype(out_dtype)
    return out


def ffn_ref(x, w1, b1, w2, b2, compute_dtype=jnp.bfloat16):
    """Plain-JAX reference with the same bf16-compute / f32-accumulate recipe."""
    xc = x.astype(compute_dtype)
    w1c = w1.astype(compute_dtype)
    w2c = w2.astype(compute_dtype)
    h = jnp.dot(xc, w1c, preferred_element_type=jnp.float32)
    h = jnp.maximum(h + b1.astype(jnp.float32), 0.0)
    y = jnp.dot(h.astype(compute_dtype), w2c,
                preferred_element_type=jnp.float32)
    y = y + b2.astype(jnp.float32)
    return y.astype(x.dtype)


if __name__ == "__main__":
    key = jax.random.PRNGKey(0)
    k_x, k_w1, k_b1, k_w2, k_b2 = jax.random.split(key, 5)

    batch, seq, d_model, d_hidden = 2, 4, 32, 256
    N = batch * seq

    x = jax.random.normal(k_x, (N, d_model), dtype=jnp.float32)
    w1 = jax.random.normal(k_w1, (d_model, d_hidden), dtype=jnp.float32) * 0.1
    b1 = jax.random.normal(k_b1, (1, d_hidden), dtype=jnp.float32) * 0.1
    w2 = jax.random.normal(k_w2, (d_hidden, d_model), dtype=jnp.float32) * 0.1
    b2 = jax.random.normal(k_b2, (1, d_model), dtype=jnp.float32) * 0.1

    ref = ffn_ref(x, w1, b1, w2, b2)
    ref_f32 = jnp.maximum(x @ w1 + b1, 0.0) @ w2 + b2

    # Weights-resident path (auto-selected at these small shapes).
    out = ffn_block(x, w1, b1, w2, b2)
    jax.block_until_ready(out)
    assert out.shape == (N, d_model)
    assert jnp.allclose(out, ref, atol=2e-2, rtol=2e-2), (
        float(jnp.max(jnp.abs(out - ref))))
    assert jnp.allclose(out, ref_f32, atol=1e-1, rtol=1e-1)

    # H-slab streaming path (forced; exercises the k-axis accumulation).
    out_s = ffn_block(x, w1, b1, w2, b2, mode="slabbed", th=128)
    jax.block_until_ready(out_s)
    assert out_s.shape == (N, d_model)
    assert jnp.allclose(out_s, ref, atol=2e-2, rtol=2e-2), (
        float(jnp.max(jnp.abs(out_s - ref))))
    assert jnp.allclose(out_s, ref_f32, atol=1e-1, rtol=1e-1)

    print("KERNEL_OK")
</pallas_src>

<mosaic_0001>
module attributes {stable_mosaic.version = 11 : i64} {
  func.func @_ffn_kernel_resident(%arg0: i32, %arg1: memref<8x128xf32, #tpu.memory_space<vmem>>, %arg2: memref<128x256xbf16, #tpu.memory_space<vmem>>, %arg3: memref<1x256xf32, #tpu.memory_space<vmem>>, %arg4: memref<256x128xbf16, #tpu.memory_space<vmem>>, %arg5: memref<1x128xf32, #tpu.memory_space<vmem>>, %arg6: memref<8x128xf32, #tpu.memory_space<vmem>>) attributes {dimension_semantics = [#tpu.dimension_semantics<parallel>], iteration_bounds = array<i64: 1>, scalar_prefetch = 0 : i64, scratch_operands = 0 : i64, tpu.core_type = #tpu.core_type<tc>, window_params = [{transform_indices = @transform_0, window_bounds = array<i64: 8, 128>}, {pipeline_mode = #tpu.pipeline_mode<synchronous>, transform_indices = @transform_1, window_bounds = array<i64: 128, 256>}, {pipeline_mode = #tpu.pipeline_mode<synchronous>, transform_indices = @transform_2, window_bounds = array<i64: 1, 256>}, {pipeline_mode = #tpu.pipeline_mode<synchronous>, transform_indices = @transform_3, window_bounds = array<i64: 256, 128>}, {pipeline_mode = #tpu.pipeline_mode<synchronous>, transform_indices = @transform_4, window_bounds = array<i64: 1, 128>}, {transform_indices = @transform_5, window_bounds = array<i64: 8, 128>}]} {
    %c0 = arith.constant 0 : index
    %c0_0 = arith.constant 0 : index
    %0 = vector.load %arg1[%c0, %c0_0] : memref<8x128xf32, #tpu.memory_space<vmem>>, vector<8x128xf32>
    %1 = arith.truncf %0 : vector<8x128xf32> to vector<8x128xbf16>
    %c0_1 = arith.constant 0 : index
    %c0_2 = arith.constant 0 : index
    %2 = vector.load %arg2[%c0_1, %c0_2] : memref<128x256xbf16, #tpu.memory_space<vmem>>, vector<128x256xbf16>
    %cst = arith.constant dense<0.000000e+00> : vector<8x256xf32>
    %3 = tpu.matmul %1, %2, %cst {dimension_numbers = #tpu.dot_dimension_numbers<[1], [0], [0], [1], [0, 0, 1, 1], [], []>} : vector<8x128xbf16>, vector<128x256xbf16>, vector<8x256xf32> -> vector<8x256xf32>
    %c0_3 = arith.constant 0 : index
    %c0_4 = arith.constant 0 : index
    %4 = vector.load %arg3[%c0_3, %c0_4] : memref<1x256xf32, #tpu.memory_space<vmem>>, vector<1x256xf32>
    %5 = vector.broadcast %4 : vector<1x256xf32> to vector<8x256xf32>
    %6 = arith.addf %3, %5 : vector<8x256xf32>
    %cst_5 = arith.constant 0.000000e+00 : f32
    %7 = vector.broadcast %cst_5 : f32 to vector<8x256xf32>
    %8 = arith.maximumf %6, %7 : vector<8x256xf32>
    %9 = arith.truncf %8 : vector<8x256xf32> to vector<8x256xbf16>
    %c0_6 = arith.constant 0 : index
    %c0_7 = arith.constant 0 : index
    %10 = vector.load %arg4[%c0_6, %c0_7] : memref<256x128xbf16, #tpu.memory_space<vmem>>, vector<256x128xbf16>
    %cst_8 = arith.constant dense<0.000000e+00> : vector<8x128xf32>
    %11 = tpu.matmul %9, %10, %cst_8 {dimension_numbers = #tpu.dot_dimension_numbers<[1], [0], [0], [1], [0, 0, 1, 1], [], []>} : vector<8x256xbf16>, vector<256x128xbf16>, vector<8x128xf32> -> vector<8x128xf32>
    %c0_9 = arith.constant 0 : index
    %c0_10 = arith.constant 0 : index
    %12 = vector.load %arg5[%c0_9, %c0_10] : memref<1x128xf32, #tpu.memory_space<vmem>>, vector<1x128xf32>
    %13 = vector.broadcast %12 : vector<1x128xf32> to vector<8x128xf32>
    %14 = arith.addf %11, %13 : vector<8x128xf32>
    %c0_11 = arith.constant 0 : index
    %c0_12 = arith.constant 0 : index
    %15 = vector.load %arg6[%c0_11, %c0_12] : memref<8x128xf32, #tpu.memory_space<vmem>>, vector<8x128xf32>
    tpu.vector_store %arg6[%c0_11, %c0_12], %14 {strides = array<i32>} : memref<8x128xf32, #tpu.memory_space<vmem>>, vector<8x128xf32>,
    return
  }
  func.func @transform_0(%arg0: i32) -> (i32, i32) {
    %c0_i32 = arith.constant 0 : i32
    %c0_i32_0 = arith.constant 0 : i32
    return %arg0, %c0_i32 : i32, i32
  }
  func.func @transform_1(%arg0: i32) -> (i32, i32) {
    %c0_i32 = arith.constant 0 : i32
    %c0_i32_0 = arith.constant 0 : i32
    %c0_i32_1 = arith.constant 0 : i32
    return %c0_i32, %c0_i32_0 : i32, i32
  }
  func.func @transform_2(%arg0: i32) -> (i32, i32) {
    %c0_i32 = arith.constant 0 : i32
    %c0_i32_0 = arith.constant 0 : i32
    %c0_i32_1 = arith.constant 0 : i32
    return %c0_i32, %c0_i32_0 : i32, i32
  }
  func.func @transform_3(%arg0: i32) -> (i32, i32) {
    %c0_i32 = arith.constant 0 : i32
    %c0_i32_0 = arith.constant 0 : i32
    %c0_i32_1 = arith.constant 0 : i32
    return %c0_i32, %c0_i32_0 : i32, i32
  }
  func.func @transform_4(%arg0: i32) -> (i32, i32) {
    %c0_i32 = arith.constant 0 : i32
    %c0_i32_0 = arith.constant 0 : i32
    %c0_i32_1 = arith.constant 0 : i32
    return %c0_i32, %c0_i32_0 : i32, i32
  }
  func.func @transform_5(%arg0: i32) -> (i32, i32) {
    %c0_i32 = arith.constant 0 : i32
    %c0_i32_0 = arith.constant 0 : i32
    return %arg0, %c0_i32 : i32, i32
  }
}

</mosaic_0001>

<llo_original>
// kernel: tpu_custom_call.1
$region0: #{tpu_custom_call.1}
  #allocation0 [shape = 'u32[]', space=smem, size = 0x4, offset = 0x4, fixed_abs, tag = 'smem constant byte address 0x4 - core index']
  #allocation1 [shape = 'u32[144,128]{1,0:T(1,128)}', space=vmem, size = 0x12000, scoped, tag = 'internal scratch']
  %s0 = inlined_call_operand.hbm [shape: f32[8,128], index: 0, kind: input, shape index: {}]
  %s1 = inlined_call_operand.hbm [shape: bf16[128,256], index: 1, kind: input, shape index: {}]
  %s2 = inlined_call_operand.vmem [shape: f32[1,256], index: 2, kind: input, shape index: {}]
  %s3 = inlined_call_operand.hbm [shape: bf16[256,128], index: 3, kind: input, shape index: {}]
  %s4 = inlined_call_operand.vmem [shape: f32[1,128], index: 4, kind: input, shape index: {}]
  %s5 = inlined_call_operand.hbm [shape: f32[8,128], index: 5, kind: output, shape index: {}]
  %s6 = sld [smem:[#allocation0]]
  $region42: #{tpu_custom_call.1} parent=0
    _
  %s8 = ssub.s32 1, %s6
  %s9 = scalar_select 0, %s8, %s6
  $region1: #{tpu_custom_call.1} parent=0
    #allocation2 [shape = 'u8[4096]{0}', space=vmem, size = 0x1000, scoped, tag = 'input window, operand 0, single buffered']
    #allocation3 [shape = 's32[1]{0}', space=sflag, size = 0x4, scoped, tag = 'scoped memory for tpu_custom_call.1']
    #allocation4 [shape = 's32[1]{0}', space=sflag, size = 0x4, scoped, tag = 'scoped memory for tpu_custom_call.1']
    #allocation5 [shape = 'u8[65536]{0}', space=vmem, size = 0x10000, scoped, tag = 'input window, operand 1, single buffered']
    #allocation6 [shape = 's32[1]{0}', space=sflag, size = 0x4, scoped, tag = 'scoped memory for tpu_custom_call.1']
    #allocation7 [shape = 'u8[65536]{0}', space=vmem, size = 0x10000, scoped, tag = 'input window, operand 3, single buffered']
    #allocation8 [shape = 'u8[4096]{0}', space=vmem, size = 0x1000, scoped, tag = 'output window, operand 0, single buffered']
    %10 = vsyncpa [#allocation3], 0
    %11 = vsyncpa [#allocation6], 0
    %12 = vsyncpa [#allocation4], 0
    // Predicated region
    $region2: #{tpu_custom_call.1} parent=1 // pred_check
      _
    $region3: #{tpu_custom_call.1} parent=1 // pred_check_branch
      %14 = sbr.rel (0) target = $region5
    $region4: #{tpu_custom_call.1} parent=1 // pred_region
      %s16 = ssub.s32 128, 128
      %17 = vsyncadd [#allocation3], %s16
      %s19 = sshll.u32 [#allocation2], 4
      %s20 = int_to_ptr.vmem [resolvable:$true] %s19
      %22 = dma.hbm_to_vmem [thread:$0]  %s0, 128, %s20, [#allocation3]
    $region5: #{tpu_custom_call.1} parent=1 // pred_fallthru
      _
    // Predicated region
    $region6: #{tpu_custom_call.1} parent=1 // pred_check
      _
    $region7: #{tpu_custom_call.1} parent=1 // pred_check_branch
      %24 = sbr.rel (0) target = $region9
    $region8: #{tpu_custom_call.1} parent=1 // pred_region
      %s26 = ssub.s32 2048, 2048
      %27 = vsyncadd [#allocation6], %s26
      %s28 = sshll.u32 [#allocation5], 4
      %s29 = int_to_ptr.vmem [resolvable:$true] %s28
      %34 = dma.hbm_to_vmem [thread:$0]  %s1, 2048, %s29, [#allocation6], 128, 128, 8
    $region9: #{tpu_custom_call.1} parent=1 // pred_fallthru
      _
    // Predicated region
    $region10: #{tpu_custom_call.1} parent=1 // pred_check
      _
    $region11: #{tpu_custom_call.1} parent=1 // pred_check_branch
      %36 = sbr.rel (0) target = $region13
    $region12: #{tpu_custom_call.1} parent=1 // pred_region
      _
    $region13: #{tpu_custom_call.1} parent=1 // pred_fallthru
      _
    // Predicated region
    $region14: #{tpu_custom_call.1} parent=1 // pred_check
      _
    $region15: #{tpu_custom_call.1} parent=1 // pred_check_branch
      %38 = sbr.rel (0) target = $region17
    $region16: #{tpu_custom_call.1} parent=1 // pred_region
      %s40 = ssub.s32 2048, 2048
      %41 = vsyncadd [#allocation6], %s40
      %s42 = sshll.u32 [#allocation7], 4
      %s43 = int_to_ptr.vmem [resolvable:$true] %s42
      %48 = dma.hbm_to_vmem [thread:$0]  %s3, 2048, %s43, [#allocation6], 64, 64, 4
    $region17: #{tpu_custom_call.1} parent=1 // pred_fallthru
      _
    // Predicated region
    $region18: #{tpu_custom_call.1} parent=1 // pred_check
      _
    $region19: #{tpu_custom_call.1} parent=1 // pred_check_branch
      %50 = sbr.rel (0) target = $region21
    $region20: #{tpu_custom_call.1} parent=1 // pred_region
      _
    $region21: #{tpu_custom_call.1} parent=1 // pred_fallthru
      _
    // Predicated region
    $region22: #{tpu_custom_call.1} parent=1 // pred_check
      _
    $region23: #{tpu_custom_call.1} parent=1 // pred_check_branch
      %52 = sbr.rel (0) target = $region25
    $region24: #{tpu_custom_call.1} parent=1 // pred_region
      %53 = dma.done [#allocation3], 128
    $region25: #{tpu_custom_call.1} parent=1 // pred_fallthru
      _
    // Predicated region
    $region26: #{tpu_custom_call.1} parent=1 // pred_check
      _
    $region27: #{tpu_custom_call.1} parent=1 // pred_check_branch
      %55 = sbr.rel (0) target = $region29
    $region28: #{tpu_custom_call.1} parent=1 // pred_region
      %56 = dma.done [#allocation6], 2048
    $region29: #{tpu_custom_call.1} parent=1 // pred_fallthru
      _
    // Predicated region
    $region30: #{tpu_custom_call.1} parent=1 // pred_check
      _
    $region31: #{tpu_custom_call.1} parent=1 // pred_check_branch
      %58 = sbr.rel (0) target = $region33
    $region32: #{tpu_custom_call.1} parent=1 // pred_region
      %59 = dma.done [#allocation6], 2048
    $region33: #{tpu_custom_call.1} parent=1 // pred_fallthru
      _
    %v61 = vld [vmem:[#allocation2] sm:$0xff]
    %v62 = vpack.c.bf16 %v61, %v61
    %v63 = vld [vmem:[#allocation5] sm:$0xff]
    %v64 = vld [vmem:[#allocation5 + $0x8] sm:$0xff]
    %v65 = vld [vmem:[#allocation5 + $0x10] sm:$0xff]
    %v66 = vld [vmem:[#allocation5 + $0x18] sm:$0xff]
    %v67 = vld [vmem:[#allocation5 + $0x20] sm:$0xff]
    %v68 = vld [vmem:[#allocation5 + $0x28] sm:$0xff]
    %v69 = vld [vmem:[#allocation5 + $0x30] sm:$0xff]
    %v70 = vld [vmem:[#allocation5 + $0x38] sm:$0xff]
    %v71 = vld [vmem:[#allocation5 + $0x40] sm:$0xff]
    %v72 = vld [vmem:[#allocation5 + $0x48] sm:$0xff]
    %v73 = vld [vmem:[#allocation5 + $0x50] sm:$0xff]
    %v74 = vld [vmem:[#allocation5 + $0x58] sm:$0xff]
    %v75 = vld [vmem:[#allocation5 + $0x60] sm:$0xff]
    %v76 = vld [vmem:[#allocation5 + $0x68] sm:$0xff]
    %v77 = vld [vmem:[#allocation5 + $0x70] sm:$0xff]
    %v78 = vld [vmem:[#allocation5 + $0x78] sm:$0xff]
    %v79 = vld [vmem:[%s2] sm:$0x3]
    %v81 = vlaneseq
    %v82 = vshrl.u32 %v81, 7
    %v83 = vsub.s32 0, %v82
    %v84 = vrot.slane %v79, %v83
    %v85 = vlaneseq
    %v86 = vshrl.u32 %v85, 7
    %v87 = vsub.s32 1, %v86
    %v88 = vrot.slane %v79, %v87
    %v107 = vunpack.c.l.b16 %v63
    %v108 = vunpack.c.h.b16 %v63
    %v109 = vunpack.c.l.b16 %v64
    %v110 = vunpack.c.h.b16 %v64
    %v111 = vunpack.c.l.b16 %v65
    %v112 = vunpack.c.h.b16 %v65
    %v113 = vunpack.c.l.b16 %v66
    %v114 = vunpack.c.h.b16 %v66
    %v115 = vunpack.c.l.b16 %v67
    %v116 = vunpack.c.h.b16 %v67
    %v117 = vunpack.c.l.b16 %v68
    %v118 = vunpack.c.h.b16 %v68
    %v119 = vunpack.c.l.b16 %v69
    %v120 = vunpack.c.h.b16 %v69
    %v121 = vunpack.c.l.b16 %v70
    %v122 = vunpack.c.h.b16 %v70
    %v123 = vunpack.c.l.b16 %v71
    %v124 = vunpack.c.h.b16 %v71
    %v125 = vunpack.c.l.b16 %v72
    %v126 = vunpack.c.h.b16 %v72
    %v127 = vunpack.c.l.b16 %v73
    %v128 = vunpack.c.h.b16 %v73
    %v129 = vunpack.c.l.b16 %v74
    %v130 = vunpack.c.h.b16 %v74
    %v131 = vunpack.c.l.b16 %v75
    %v132 = vunpack.c.h.b16 %v75
    %v133 = vunpack.c.l.b16 %v76
    %v134 = vunpack.c.h.b16 %v76
    %v135 = vunpack.c.l.b16 %v77
    %v136 = vunpack.c.h.b16 %v77
    %v137 = vunpack.c.l.b16 %v78
    %v138 = vunpack.c.h.b16 %v78
    %v139 = vpack.c.b16 %v109, %v107
    %v140 = vpack.c.b16 %v110, %v108
    %v141 = vpack.c.b16 %v113, %v111
    %v142 = vpack.c.b16 %v114, %v112
    %v143 = vpack.c.b16 %v117, %v115
    %v144 = vpack.c.b16 %v118, %v116
    %v145 = vpack.c.b16 %v121, %v119
    %v146 = vpack.c.b16 %v122, %v120
    %v147 = vpack.c.b16 %v125, %v123
    %v148 = vpack.c.b16 %v126, %v124
    %v149 = vpack.c.b16 %v129, %v127
    %v150 = vpack.c.b16 %v130, %v128
    %v151 = vpack.c.b16 %v133, %v131
    %v152 = vpack.c.b16 %v134, %v132
    %v153 = vpack.c.b16 %v137, %v135
    %v154 = vpack.c.b16 %v138, %v136
    %171 = vmatprep.subr.bf16.mxu0 %v140
    %172 = vmatpush1.bf16.msra.mxu0 %v139
    %173 = vmatprep.subr.bf16.mxu0 %v142
    %174 = vmatpush1.bf16.msra.mxu0 %v141
    %175 = vmatprep.subr.bf16.mxu0 %v144
    %176 = vmatpush1.bf16.msra.mxu0 %v143
    %177 = vmatprep.subr.bf16.mxu0 %v146
    %178 = vmatpush1.bf16.msra.mxu0 %v145
    %179 = vmatprep.subr.bf16.mxu0 %v148
    %180 = vmatpush1.bf16.msra.mxu0 %v147
    %181 = vmatprep.subr.bf16.mxu0 %v150
    %182 = vmatpush1.bf16.msra.mxu0 %v149
    %183 = vmatprep.subr.bf16.mxu0 %v152
    %184 = vmatpush1.bf16.msra.mxu0 %v151
    %185 = vmatprep.subr.bf16.mxu0 %v154
    %186 = vmatpush1.bf16.msra.mxu0 %v153
    %187 = vmatprep.subr.bf16.mxu0 0
    %188 = vmatpush1.bf16.msra.mxu0 0
    %189 = vmatprep.subr.bf16.mxu0 0
    %190 = vmatpush1.bf16.msra.mxu0 0
    %191 = vmatprep.subr.bf16.mxu0 0
    %192 = vmatpush1.bf16.msra.mxu0 0
    %193 = vmatprep.subr.bf16.mxu0 0
    %194 = vmatpush1.bf16.msra.mxu0 0
    %195 = vmatprep.subr.bf16.mxu0 0
    %196 = vmatpush1.bf16.msra.mxu0 0
    %197 = vmatprep.subr.bf16.mxu0 0
    %198 = vmatpush1.bf16.msra.mxu0 0
    %199 = vmatprep.subr.bf16.mxu0 0
    %200 = vmatpush1.bf16.msra.mxu0 0
    %201 = vmatprep.subr.bf16.mxu0 0
    %202 = vmatpush1.bf16.msra.mxu0 0
    %203 = vmatprep.mubr.bf16.mxu0 0
    %204 = vmatmul.mubr.bf16.gmra.mrb[0].mxu0 %v62
    %v205 = vpop.f32.mrb[0].mxu0
    %v206 = vadd.f32 %v84, %v205
    %v207 = vpop.f32.mrb[0].mxu0
    %v208 = vadd.f32 %v88, %v207
    %v209 = vpop.f32.mrb[0].mxu0
    %v210 = vpop.f32.mrb[0].mxu0
    %211 = vdwg.mxu0
    %v212 = vmax.f32 %v206, 0.0
    %v213 = vmax.f32 %v208, 0.0
    %v214 = vpack.c.bf16 %v212, %v212
    %v215 = vpack.c.bf16 %v213, %v213
    %v216 = vld [vmem:[#allocation7] sm:$0xf]
    %v217 = vld [vmem:[#allocation7 + $0x4] sm:$0xf]
    %v218 = vld [vmem:[#allocation7 + $0x8] sm:$0xf]
    %v219 = vld [vmem:[#allocation7 + $0xc] sm:$0xf]
    %v220 = vld [vmem:[#allocation7 + $0x10] sm:$0xf]
    %v221 = vld [vmem:[#allocation7 + $0x14] sm:$0xf]
    %v222 = vld [vmem:[#allocation7 + $0x18] sm:$0xf]
    %v223 = vld [vmem:[#allocation7 + $0x1c] sm:$0xf]
    %v224 = vld [vmem:[#allocation7 + $0x20] sm:$0xf]
    %v225 = vld [vmem:[#allocation7 + $0x24] sm:$0xf]
    %v226 = vld [vmem:[#allocation7 + $0x28] sm:$0xf]
    %v227 = vld [vmem:[#allocation7 + $0x2c] sm:$0xf]
    %v228 = vld [vmem:[#allocation7 + $0x30] sm:$0xf]
    %v229 = vld [vmem:[#allocation7 + $0x34] sm:$0xf]
    %v230 = vld [vmem:[#allocation7 + $0x38] sm:$0xf]
    %v231 = vld [vmem:[#allocation7 + $0x3c] sm:$0xf]
    %v232 = vld [vmem:[#allocation7 + $0x40] sm:$0xf]
    %v233 = vld [vmem:[#allocation7 + $0x44] sm:$0xf]
    %v234 = vld [vmem:[#allocation7 + $0x48] sm:$0xf]
    %v235 = vld [vmem:[#allocation7 + $0x4c] sm:$0xf]
    %v236 = vld [vmem:[#allocation7 + $0x50] sm:$0xf]
    %v237 = vld [vmem:[#allocation7 + $0x54] sm:$0xf]
    %v238 = vld [vmem:[#allocation7 + $0x58] sm:$0xf]
    %v239 = vld [vmem:[#allocation7 + $0x5c] sm:$0xf]
    %v240 = vld [vmem:[#allocation7 + $0x60] sm:$0xf]
    %v241 = vld [vmem:[#allocation7 + $0x64] sm:$0xf]
    %v242 = vld [vmem:[#allocation7 + $0x68] sm:$0xf]
    %v243 = vld [vmem:[#allocation7 + $0x6c] sm:$0xf]
    %v244 = vld [vmem:[#allocation7 + $0x70] sm:$0xf]
    %v245 = vld [vmem:[#allocation7 + $0x74] sm:$0xf]
    %v246 = vld [vmem:[#allocation7 + $0x78] sm:$0xf]
    %v247 = vld [vmem:[#allocation7 + $0x7c] sm:$0xf]
    %v248 = vld [vmem:[%s4] sm:$0x1]
    %v250 = vlaneseq
    %v251 = vshrl.u32 %v250, 7
    %v252 = vsub.s32 0, %v251
    %v253 = vrot.slane %v248, %v252
    %v287 = vunpack.c.l.b16 %v216
    %v288 = vunpack.c.l.b16 %v217
    %v289 = vunpack.c.l.b16 %v218
    %v290 = vunpack.c.l.b16 %v219
    %v291 = vunpack.c.l.b16 %v220
    %v292 = vunpack.c.l.b16 %v221
    %v293 = vunpack.c.l.b16 %v222
    %v294 = vunpack.c.l.b16 %v223
    %v295 = vunpack.c.l.b16 %v224
    %v296 = vunpack.c.l.b16 %v225
    %v297 = vunpack.c.l.b16 %v226
    %v298 = vunpack.c.l.b16 %v227
    %v299 = vunpack.c.l.b16 %v228
    %v300 = vunpack.c.l.b16 %v229
    %v301 = vunpack.c.l.b16 %v230
    %v302 = vunpack.c.l.b16 %v231
    %v303 = vunpack.c.l.b16 %v232
    %v304 = vunpack.c.l.b16 %v233
    %v305 = vunpack.c.l.b16 %v234
    %v306 = vunpack.c.l.b16 %v235
    %v307 = vunpack.c.l.b16 %v236
    %v308 = vunpack.c.l.b16 %v237
    %v309 = vunpack.c.l.b16 %v238
    %v310 = vunpack.c.l.b16 %v239
    %v311 = vunpack.c.l.b16 %v240
    %v312 = vunpack.c.l.b16 %v241
    %v313 = vunpack.c.l.b16 %v242
    %v314 = vunpack.c.l.b16 %v243
    %v315 = vunpack.c.l.b16 %v244
    %v316 = vunpack.c.l.b16 %v245
    %v317 = vunpack.c.l.b16 %v246
    %v318 = vunpack.c.l.b16 %v247
    %v319 = vpack.c.b16 %v288, %v287
    %v320 = vpack.c.b16 %v290, %v289
    %v321 = vpack.c.b16 %v292, %v291
    %v322 = vpack.c.b16 %v294, %v293
    %v323 = vpack.c.b16 %v296, %v295
    %v324 = vpack.c.b16 %v298, %v297
    %v325 = vpack.c.b16 %v300, %v299
    %v326 = vpack.c.b16 %v302, %v301
    %v327 = vpack.c.b16 %v304, %v303
    %v328 = vpack.c.b16 %v306, %v305
    %v329 = vpack.c.b16 %v308, %v307
    %v330 = vpack.c.b16 %v310, %v309
    %v331 = vpack.c.b16 %v312, %v311
    %v332 = vpack.c.b16 %v314, %v313
    %v333 = vpack.c.b16 %v316, %v315
    %v334 = vpack.c.b16 %v318, %v317
    %351 = vmatprep.subr.bf16.mxu0 0
    %352 = vmatpush1.bf16.msra.mxu0 %v319
    %353 = vmatprep.subr.bf16.mxu0 0
    %354 = vmatpush1.bf16.msra.mxu0 %v320
    %355 = vmatprep.subr.bf16.mxu0 0
    %356 = vmatpush1.bf16.msra.mxu0 %v321
    %357 = vmatprep.subr.bf16.mxu0 0
    %358 = vmatpush1.bf16.msra.mxu0 %v322
    %359 = vmatprep.subr.bf16.mxu0 0
    %360 = vmatpush1.bf16.msra.mxu0 %v323
    %361 = vmatprep.subr.bf16.mxu0 0
    %362 = vmatpush1.bf16.msra.mxu0 %v324
    %363 = vmatprep.subr.bf16.mxu0 0
    %364 = vmatpush1.bf16.msra.mxu0 %v325
    %365 = vmatprep.subr.bf16.mxu0 0
    %366 = vmatpush1.bf16.msra.mxu0 %v326
    %367 = vmatprep.subr.bf16.mxu0 0
    %368 = vmatpush1.bf16.msra.mxu0 %v327
    %369 = vmatprep.subr.bf16.mxu0 0
    %370 = vmatpush1.bf16.msra.mxu0 %v328
    %371 = vmatprep.subr.bf16.mxu0 0
    %372 = vmatpush1.bf16.msra.mxu0 %v329
    %373 = vmatprep.subr.bf16.mxu0 0
    %374 = vmatpush1.bf16.msra.mxu0 %v330
    %375 = vmatprep.subr.bf16.mxu0 0
    %376 = vmatpush1.bf16.msra.mxu0 %v331
    %377 = vmatprep.subr.bf16.mxu0 0
    %378 = vmatpush1.bf16.msra.mxu0 %v332
    %379 = vmatprep.subr.bf16.mxu0 0
    %380 = vmatpush1.bf16.msra.mxu0 %v333
    %381 = vmatprep.subr.bf16.mxu0 0
    %382 = vmatpush1.bf16.msra.mxu0 %v334
    %383 = vmatprep.mubr.bf16.mxu0 %v215
    %384 = vmatmul.mubr.bf16.gmra.mrb[0].mxu0 %v214
    %v385 = vpop.f32.mrb[0].mxu0
    %v386 = vadd.f32 %v253, %v385
    %v387 = vpop.f32.mrb[0].mxu0
    %v388 = vpop.f32.mrb[0].mxu0
    %v389 = vpop.f32.mrb[0].mxu0
    %390 = vdwg.mxu0
    %391 = vst [vmem:[#allocation8] sm:$0xff] %v386
    // Predicated region
    $region34: #{tpu_custom_call.1} parent=1 // pred_check
      _
    $region35: #{tpu_custom_call.1} parent=1 // pred_check_branch
      %393 = sbr.rel (0) target = $region37
    $region36: #{tpu_custom_call.1} parent=1 // pred_region
      %s395 = ssub.s32 128, 128
      %396 = vsyncadd [#allocation4], %s395
      %s398 = sshll.u32 [#allocation8], 4
      %s399 = int_to_ptr.vmem [resolvable:$true] %s398
      %401 = dma.vmem_to_hbm [thread:$0]  %s399, 128, %s5, [#allocation4]
    $region37: #{tpu_custom_call.1} parent=1 // pred_fallthru
      _
    // Predicated region
    $region38: #{tpu_custom_call.1} parent=1 // pred_check
      _
    $region39: #{tpu_custom_call.1} parent=1 // pred_check_branch
      %403 = sbr.rel (0) target = $region41
    $region40: #{tpu_custom_call.1} parent=1 // pred_region
      %404 = dma.done [#allocation4], 128
    $region41: #{tpu_custom_call.1} parent=1 // pred_fallthru
      _
    %405 = vsyncpa [#allocation3], 1
    %406 = vsyncpa [#allocation6], 1
    %407 = vsyncpa [#allocation4], 1

</llo_original>
